<compile_context>
chip_gen: v7x
topology: tpu7x:2x2x1
jax: 0.10.0
libtpu: 0.0.40
codegen_flags: <defaults>
</compile_context>

<pallas_src>
import jax
import jax.numpy as jnp
from jax.experimental import pallas as pl
from jax.experimental.pallas import tpu as pltpu


def _round_up(x, m):
    return ((x + m - 1) // m) * m


# TODO(synk): only the eval-mode BatchNorm ('BN') head norm is implemented
# (folded into the conv); the 'GN' group-norm config option is not.
def _fold_bn(w3, b3, bn):
    """Fold eval-mode BatchNorm2d into the preceding 3x3 conv (host, once)."""
    scale = bn['gamma'] / jnp.sqrt(bn['var'] + bn['eps'])
    shift = bn['beta'] - bn['mean'] * scale
    return w3 * scale, b3 * scale + shift


def _make_kernel(tile_q, wp, c2, cls_n, reg_n, dim_s, dim_e):
    def kernel(x_ref, w3_ref, b3_ref, w1_ref, b1_ref, cls_ref, reg_ref):
        # 3x3 conv of BOTH heads: 3 dy-dots with K = 3*Cin (dx pre-stacked into
        # channels on the host; dy*wp offsets are sublane-aligned since wp%16==0).
        acc = jnp.zeros((tile_q, c2), jnp.float32)
        for dy in range(3):
            tap = x_ref[0, 0, dy * wp:dy * wp + tile_q, :]       # (tile_q, 3*Cin) bf16
            acc = acc + jnp.dot(tap, w3_ref[dy],
                                preferred_element_type=jnp.float32)

        # folded-BN bias + ReLU in f32, then bf16 operand for the fused 1x1 dot.
        h = jnp.maximum(acc + b3_ref[...], 0.0).astype(jnp.bfloat16)
        out = jnp.dot(h, w1_ref[...],
                      preferred_element_type=jnp.float32) + b1_ref[...]
        out_t = out.T                                            # (128, tile_q) lane-dense

        # ---- class head: sigmoid_hm ----
        cls_ref[0] = jnp.clip(jax.nn.sigmoid(out_t[0:cls_n, :]),
                              1e-4, 1.0 - 1e-4)

        # ---- regression head: assemble full block, single contiguous store ----
        reg = out_t[cls_n:cls_n + reg_n, :]
        pieces = []
        if dim_s > 0:
            pieces.append(reg[0:dim_s, :])
        if dim_e > dim_s:
            pieces.append(jax.nn.sigmoid(reg[dim_s:dim_e, :]) - 0.5)
        if reg_n > dim_e:
            ori = reg[dim_e:reg_n, :]
            inv = jax.lax.rsqrt(
                jnp.maximum(jnp.sum(ori * ori, axis=0, keepdims=True), 1e-24))
            pieces.append(ori * inv)
        reg_ref[0] = pieces[0] if len(pieces) == 1 else jnp.concatenate(pieces, axis=0)

    return kernel


def build_params(key, cin, chead, classes, regression):
    ks = jax.random.split(key, 8)
    w3c = jax.random.normal(ks[0], (3, 3, cin, chead), jnp.float32) * 0.1
    b3c = jax.random.normal(ks[1], (chead,), jnp.float32) * 0.01
    w1c = jax.random.normal(ks[2], (chead, classes), jnp.float32) * 0.1
    b1c = jnp.full((classes,), -2.19, jnp.float32)     # class_head[-1].bias.fill_(-2.19)
    w3r = jax.random.normal(ks[3], (3, 3, cin, chead), jnp.float32) * 0.1
    b3r = jnp.zeros((chead,), jnp.float32)             # _fill_fc_weights -> bias = 0
    w1r = jax.random.normal(ks[4], (chead, regression), jnp.float32) * 0.1
    b1r = jnp.zeros((regression,), jnp.float32)

    def bn_stats(k):
        k1, k2, k3, k4 = jax.random.split(k, 4)
        return dict(gamma=1.0 + 0.2 * jax.random.normal(k1, (chead,), jnp.float32),
                    beta=0.1 * jax.random.normal(k2, (chead,), jnp.float32),
                    mean=0.1 * jax.random.normal(k3, (chead,), jnp.float32),
                    var=1.0 + 0.2 * jax.random.uniform(k4, (chead,), jnp.float32),
                    eps=1e-5)

    return dict(w3c=w3c, b3c=b3c, bn_c=bn_stats(ks[5]), w1c=w1c, b1c=b1c,
                w3r=w3r, b3r=b3r, bn_r=bn_stats(ks[6]), w1r=w1r, b1r=b1r)


def smoke_predictor_forward(features, params, reg_channels=(1, 2, 3, 2),
                            tile_q=2048):
    """features: (N, Cin, H, W) float32 NCHW.  Returns [head_class, head_reg] NCHW."""
    N, Cin, H, W = features.shape
    cls_n = params['w1c'].shape[-1]
    reg_n = params['w1r'].shape[-1]
    chead = params['w3c'].shape[-1]
    assert sum(reg_channels) == reg_n
    dim_s, dim_e = sum(reg_channels[:2]), sum(reg_channels[:3])
    assert 0 <= dim_s <= dim_e <= reg_n
    assert cls_n + reg_n <= 128

    Hp = H + 2
    Wp = _round_up(W + 2, 16)                   # row stride, 16-aligned for bf16 sublanes
    Q = H * Wp                                  # strided-flat output positions
    tile_q = max(128, _round_up(min(tile_q, _round_up(Q, 128)), 128))
    S = pl.cdiv(Q, tile_q)
    Qp = S * tile_q
    WIN = tile_q + 2 * Wp                       # tile + dy halo (dx folded into channels)
    K = 3 * Cin                                 # conv contraction per dy
    COUT = 128                                  # lane-padded fused 1x1 output width

    # ---- host-side weight prep: fold BN, fuse heads, pack (dy, dx*Cin+c), bf16 ----
    w3c, b3c = _fold_bn(params['w3c'], params['b3c'], params['bn_c'])
    w3r, b3r = _fold_bn(params['w3r'], params['b3r'], params['bn_r'])
    C2 = _round_up(2 * chead, 128)
    w3f = jnp.zeros((3, 3, Cin, C2), jnp.float32)
    w3f = w3f.at[..., :chead].set(w3c).at[..., chead:2 * chead].set(w3r)
    w3f = w3f.reshape(3, K, C2).astype(jnp.bfloat16)
    b3f = jnp.zeros((1, C2), jnp.float32)
    b3f = b3f.at[0, :chead].set(b3c).at[0, chead:2 * chead].set(b3r)
    w1f = jnp.zeros((C2, COUT), jnp.float32)
    w1f = w1f.at[:chead, :cls_n].set(params['w1c'])
    w1f = w1f.at[chead:2 * chead, cls_n:cls_n + reg_n].set(params['w1r'])
    w1f = w1f.astype(jnp.bfloat16)
    b1f = jnp.zeros((1, COUT), jnp.float32)
    b1f = b1f.at[0, :cls_n].set(params['b1c'])
    b1f = b1f.at[0, cls_n:cls_n + reg_n].set(params['b1r'])

    # ---- layout glue: zero-pad, flatten with 16-aligned row stride Wp,
    #      dx-stack into channels (K=3*Cin), bf16, pre-window halo tiles ----
    xp = jnp.pad(features, ((0, 0), (0, 0), (1, 1), (1, Wp - W - 1)))
    xflat = jnp.transpose(xp, (0, 2, 3, 1)).reshape(N, Hp * Wp, Cin)
    L = (S - 1) * tile_q + WIN
    xflat = jnp.pad(xflat, ((0, 0), (0, max(0, L + 2 - Hp * Wp)), (0, 0)))
    xflat = xflat.astype(jnp.bfloat16)
    xdx = jnp.concatenate([xflat[:, d:d + L, :] for d in range(3)], axis=-1)
    xwin = jnp.stack([xdx[:, s * tile_q:s * tile_q + WIN, :] for s in range(S)],
                     axis=1)                                   # (N, S, WIN, 3*Cin)

    kernel = _make_kernel(tile_q, Wp, C2, cls_n, reg_n, dim_s, dim_e)

    in_specs = [
        pl.BlockSpec((1, 1, WIN, K), lambda n, s: (n, s, 0, 0)),   # halo window / step
        pl.BlockSpec((3, K, C2), lambda n, s: (0, 0, 0)),
        pl.BlockSpec((1, C2), lambda n, s: (0, 0)),
        pl.BlockSpec((C2, COUT), lambda n, s: (0, 0)),
        pl.BlockSpec((1, COUT), lambda n, s: (0, 0)),
    ]
    out_specs = [
        pl.BlockSpec((1, cls_n, tile_q), lambda n, s: (n, 0, s)),
        pl.BlockSpec((1, reg_n, tile_q), lambda n, s: (n, 0, s)),
    ]

    # Per-step VMEM estimate (windowed: no resident full feature map -> v7x-safe).
    lpad = lambda c: _round_up(c, 128)
    est = (2 * WIN * lpad(K) * 2                     # window block (bf16, double-buffered)
           + 3 * _round_up(K, 16) * lpad(C2) * 2     # fused 3x3 weights (bf16)
           + _round_up(C2, 16) * lpad(COUT) * 2      # fused 1x1 weight (bf16)
           + 8 * (lpad(C2) + lpad(COUT)) * 4         # biases (f32)
           + tile_q * lpad(C2) * 6                   # conv acc (f32) + h (bf16)
           + 2 * tile_q * lpad(COUT) * 4             # 1x1 out + transpose (f32)
           + 3 * tile_q * lpad(K) * 2                # tap temporaries (bf16)
           + 2 * 2 * 8 * tile_q * 4)                 # output blocks (double-buffered)
    vmem_limit = int(min(max(est * 3 // 2 + (4 << 20), 16 << 20), 40 << 20))

    cost = pl.CostEstimate(
        flops=2 * N * S * tile_q * (3 * K * C2 + C2 * COUT),
        transcendentals=N * Qp * (cls_n + (dim_e - dim_s) + 1),
        bytes_accessed=(N * S * WIN * K * 2 + 3 * K * C2 * 2 + C2 * COUT * 2
                        + (C2 + COUT) * 4 + N * (cls_n + reg_n) * Qp * 4))

    cls_f, reg_f = pl.pallas_call(
        kernel,
        out_shape=(jax.ShapeDtypeStruct((N, cls_n, Qp), jnp.float32),
                   jax.ShapeDtypeStruct((N, reg_n, Qp), jnp.float32)),
        grid_spec=pltpu.PrefetchScalarGridSpec(
            num_scalar_prefetch=0, grid=(N, S),
            in_specs=in_specs, out_specs=out_specs),
        compiler_params=pltpu.CompilerParams(
            dimension_semantics=("parallel", "parallel"),
            vmem_limit_bytes=vmem_limit),
        cost_estimate=cost,
    )(xwin, w3f, b3f, w1f, b1f)

    # Outputs are already N x C x (H*Wp): drop padded columns -> NCHW, no transpose.
    head_class = cls_f[:, :, :Q].reshape(N, cls_n, H, Wp)[..., :W]
    head_reg = reg_f[:, :, :Q].reshape(N, reg_n, H, Wp)[..., :W]
    return [head_class, head_reg]


def _reference(features, params, reg_channels):
    """Plain-JAX reference using the same bf16-rounded operands as the kernel
    (folded-BN bf16 conv weights, bf16 h / w1 for the 1x1), so the comparison
    only sees accumulation-order differences."""
    x = jnp.transpose(features.astype(jnp.bfloat16).astype(jnp.float32),
                      (0, 2, 3, 1))

    def head(w3, b3, bn, w1, b1):
        w3f, b3f = _fold_bn(w3, b3, bn)
        w3f = w3f.astype(jnp.bfloat16).astype(jnp.float32)
        h = jax.lax.conv_general_dilated(
            x, w3f, (1, 1), ((1, 1), (1, 1)),
            dimension_numbers=('NHWC', 'HWIO', 'NHWC'),
            precision=jax.lax.Precision.HIGHEST) + b3f
        h = jnp.maximum(h, 0.0).astype(jnp.bfloat16).astype(jnp.float32)
        w1b = w1.astype(jnp.bfloat16).astype(jnp.float32)
        return jnp.einsum('nhwc,co->nhwo', h, w1b,
                          precision=jax.lax.Precision.HIGHEST) + b1

    hc = head(params['w3c'], params['b3c'], params['bn_c'],
              params['w1c'], params['b1c'])
    hc = jnp.clip(jax.nn.sigmoid(hc), 1e-4, 1.0 - 1e-4)

    hr = head(params['w3r'], params['b3r'], params['bn_r'],
              params['w1r'], params['b1r'])
    dim_s, dim_e = sum(reg_channels[:2]), sum(reg_channels[:3])
    dims = hr[..., dim_s:dim_e]
    ori = hr[..., dim_e:]
    norm = jnp.sqrt(jnp.sum(ori * ori, axis=-1, keepdims=True))
    hr = jnp.concatenate([hr[..., :dim_s],
                          jax.nn.sigmoid(dims) - 0.5,
                          ori / jnp.maximum(norm, 1e-12)], axis=-1)
    return (jnp.transpose(hc, (0, 3, 1, 2)), jnp.transpose(hr, (0, 3, 1, 2)))


if __name__ == "__main__":
    key = jax.random.PRNGKey(0)
    k_feat, k_par = jax.random.split(key)

    N, Cin, H, W = 2, 4, 16, 16            # small test shapes
    classes = 3                            # len(DETECT_CLASSES)
    reg_channels = (1, 2, 3, 2)            # REGRESSION_CHANNEL
    regression = sum(reg_channels)         # REGRESSION_HEADS = 8
    head_conv = 32                         # NUM_CHANNEL (shrunk for test)

    feats = jax.random.normal(k_feat, (N, Cin, H, W), jnp.float32)
    params = build_params(k_par, Cin, head_conv, classes, regression)

    # tile_q=128 at this tiny size so the multi-tile / halo path is exercised.
    head_class, head_reg = smoke_predictor_forward(feats, params, reg_channels,
                                                   tile_q=128)
    jax.block_until_ready((head_class, head_reg))

    ref_cls, ref_reg = _reference(feats, params, reg_channels)
    assert head_class.shape == (N, classes, H, W)
    assert head_reg.shape == (N, regression, H, W)
    assert jnp.allclose(head_class, ref_cls, atol=3e-3, rtol=3e-3)
    assert jnp.allclose(head_reg, ref_reg, atol=3e-3, rtol=3e-3)

    print("KERNEL_OK")
</pallas_src>

<mosaic_0001>
module attributes {stable_mosaic.version = 11 : i64} {
  func.func @kernel(%arg0: i32, %arg1: i32, %arg2: memref<1x1x192x12xbf16, #tpu.memory_space<vmem>>, %arg3: memref<3x12x128xbf16, #tpu.memory_space<vmem>>, %arg4: memref<1x128xf32, #tpu.memory_space<vmem>>, %arg5: memref<128x128xbf16, #tpu.memory_space<vmem>>, %arg6: memref<1x128xf32, #tpu.memory_space<vmem>>, %arg7: memref<1x3x128xf32, #tpu.memory_space<vmem>>, %arg8: memref<1x8x128xf32, #tpu.memory_space<vmem>>) attributes {dimension_semantics = [#tpu.dimension_semantics<parallel>, #tpu.dimension_semantics<parallel>], iteration_bounds = array<i64: 2, 4>, scalar_prefetch = 0 : i64, scratch_operands = 0 : i64, tpu.core_type = #tpu.core_type<tc>, window_params = [{transform_indices = @transform_0, window_bounds = array<i64: 1, 1, 192, 12>}, {pipeline_mode = #tpu.pipeline_mode<synchronous>, transform_indices = @transform_1, window_bounds = array<i64: 3, 12, 128>}, {pipeline_mode = #tpu.pipeline_mode<synchronous>, transform_indices = @transform_2, window_bounds = array<i64: 1, 128>}, {pipeline_mode = #tpu.pipeline_mode<synchronous>, transform_indices = @transform_3, window_bounds = array<i64: 128, 128>}, {pipeline_mode = #tpu.pipeline_mode<synchronous>, transform_indices = @transform_4, window_bounds = array<i64: 1, 128>}, {transform_indices = @transform_5, window_bounds = array<i64: 1, 3, 128>}, {transform_indices = @transform_6, window_bounds = array<i64: 1, 8, 128>}]} {
    %cst = arith.constant 0.000000e+00 : f32
    %0 = vector.broadcast %cst : f32 to vector<128x128xf32>
    %c0 = arith.constant 0 : index
    %c0_0 = arith.constant 0 : index
    %c0_1 = arith.constant 0 : index
    %c0_2 = arith.constant 0 : index
    %1 = vector.load %arg2[%c0, %c0_0, %c0_1, %c0_2] : memref<1x1x192x12xbf16, #tpu.memory_space<vmem>>, vector<1x1x128x12xbf16>
    %2 = vector.shape_cast %1 : vector<1x1x128x12xbf16> to vector<128x12xbf16>
    %c0_3 = arith.constant 0 : index
    %c0_4 = arith.constant 0 : index
    %c0_5 = arith.constant 0 : index
    %3 = vector.load %arg3[%c0_3, %c0_4, %c0_5] : memref<3x12x128xbf16, #tpu.memory_space<vmem>>, vector<1x12x128xbf16>
    %4 = vector.shape_cast %3 : vector<1x12x128xbf16> to vector<12x128xbf16>
    %cst_6 = arith.constant dense<0.000000e+00> : vector<128x128xf32>
    %5 = tpu.matmul %2, %4, %cst_6 {dimension_numbers = #tpu.dot_dimension_numbers<[1], [0], [0], [1], [0, 0, 1, 1], [], []>} : vector<128x12xbf16>, vector<12x128xbf16>, vector<128x128xf32> -> vector<128x128xf32>
    %6 = arith.addf %0, %5 : vector<128x128xf32>
    %c0_7 = arith.constant 0 : index
    %c0_8 = arith.constant 0 : index
    %c32 = arith.constant 32 : index
    %c0_9 = arith.constant 0 : index
    %7 = vector.load %arg2[%c0_7, %c0_8, %c32, %c0_9] : memref<1x1x192x12xbf16, #tpu.memory_space<vmem>>, vector<1x1x128x12xbf16>
    %8 = vector.shape_cast %7 : vector<1x1x128x12xbf16> to vector<128x12xbf16>
    %c1 = arith.constant 1 : index
    %c0_10 = arith.constant 0 : index
    %c0_11 = arith.constant 0 : index
    %9 = vector.load %arg3[%c1, %c0_10, %c0_11] : memref<3x12x128xbf16, #tpu.memory_space<vmem>>, vector<1x12x128xbf16>
    %10 = vector.shape_cast %9 : vector<1x12x128xbf16> to vector<12x128xbf16>
    %cst_12 = arith.constant dense<0.000000e+00> : vector<128x128xf32>
    %11 = tpu.matmul %8, %10, %cst_12 {dimension_numbers = #tpu.dot_dimension_numbers<[1], [0], [0], [1], [0, 0, 1, 1], [], []>} : vector<128x12xbf16>, vector<12x128xbf16>, vector<128x128xf32> -> vector<128x128xf32>
    %12 = arith.addf %6, %11 : vector<128x128xf32>
    %c0_13 = arith.constant 0 : index
    %c0_14 = arith.constant 0 : index
    %c64 = arith.constant 64 : index
    %c0_15 = arith.constant 0 : index
    %13 = vector.load %arg2[%c0_13, %c0_14, %c64, %c0_15] : memref<1x1x192x12xbf16, #tpu.memory_space<vmem>>, vector<1x1x128x12xbf16>
    %14 = vector.shape_cast %13 : vector<1x1x128x12xbf16> to vector<128x12xbf16>
    %c2 = arith.constant 2 : index
    %c0_16 = arith.constant 0 : index
    %c0_17 = arith.constant 0 : index
    %15 = vector.load %arg3[%c2, %c0_16, %c0_17] : memref<3x12x128xbf16, #tpu.memory_space<vmem>>, vector<1x12x128xbf16>
    %16 = vector.shape_cast %15 : vector<1x12x128xbf16> to vector<12x128xbf16>
    %cst_18 = arith.constant dense<0.000000e+00> : vector<128x128xf32>
    %17 = tpu.matmul %14, %16, %cst_18 {dimension_numbers = #tpu.dot_dimension_numbers<[1], [0], [0], [1], [0, 0, 1, 1], [], []>} : vector<128x12xbf16>, vector<12x128xbf16>, vector<128x128xf32> -> vector<128x128xf32>
    %18 = arith.addf %12, %17 : vector<128x128xf32>
    %c0_19 = arith.constant 0 : index
    %c0_20 = arith.constant 0 : index
    %19 = vector.load %arg4[%c0_19, %c0_20] : memref<1x128xf32, #tpu.memory_space<vmem>>, vector<1x128xf32>
    %20 = vector.broadcast %19 : vector<1x128xf32> to vector<128x128xf32>
    %21 = arith.addf %18, %20 : vector<128x128xf32>
    %cst_21 = arith.constant 0.000000e+00 : f32
    %22 = vector.broadcast %cst_21 : f32 to vector<128x128xf32>
    %23 = arith.maximumf %21, %22 : vector<128x128xf32>
    %24 = arith.truncf %23 : vector<128x128xf32> to vector<128x128xbf16>
    %c0_22 = arith.constant 0 : index
    %c0_23 = arith.constant 0 : index
    %25 = vector.load %arg5[%c0_22, %c0_23] : memref<128x128xbf16, #tpu.memory_space<vmem>>, vector<128x128xbf16>
    %cst_24 = arith.constant dense<0.000000e+00> : vector<128x128xf32>
    %26 = tpu.matmul %24, %25, %cst_24 {dimension_numbers = #tpu.dot_dimension_numbers<[1], [0], [0], [1], [0, 0, 1, 1], [], []>} : vector<128x128xbf16>, vector<128x128xbf16>, vector<128x128xf32> -> vector<128x128xf32>
    %c0_25 = arith.constant 0 : index
    %c0_26 = arith.constant 0 : index
    %27 = vector.load %arg6[%c0_25, %c0_26] : memref<1x128xf32, #tpu.memory_space<vmem>>, vector<1x128xf32>
    %28 = vector.broadcast %27 : vector<1x128xf32> to vector<128x128xf32>
    %29 = arith.addf %26, %28 : vector<128x128xf32>
    %30 = tpu.transpose %29, [1, 0] : vector<128x128xf32> -> vector<128x128xf32>
    %31 = vector.extract_strided_slice %30 {offsets = [0, 0], sizes = [3, 128], strides = [1, 1]} : vector<128x128xf32> to vector<3x128xf32>
    %32 = arith.negf %31 : vector<3x128xf32>
    %33 = math.exp %32 : vector<3x128xf32>
    %cst_27 = arith.constant 1.000000e+00 : f32
    %34 = vector.broadcast %cst_27 : f32 to vector<3x128xf32>
    %35 = arith.addf %34, %33 : vector<3x128xf32>
    %36 = arith.divf %34, %35 : vector<3x128xf32>
    %cst_28 = arith.constant 9.99999974E-5 : f32
    %cst_29 = arith.constant 0.999899983 : f32
    %37 = vector.broadcast %cst_28 : f32 to vector<3x128xf32>
    %38 = arith.maximumf %37, %36 : vector<3x128xf32>
    %39 = vector.broadcast %cst_29 : f32 to vector<3x128xf32>
    %40 = arith.minimumf %39, %38 : vector<3x128xf32>
    %c0_30 = arith.constant 0 : index
    %c0_31 = arith.constant 0 : index
    %c0_32 = arith.constant 0 : index
    %41 = vector.load %arg7[%c0_30, %c0_31, %c0_32] : memref<1x3x128xf32, #tpu.memory_space<vmem>>, vector<1x3x128xf32>
    %42 = vector.shape_cast %41 : vector<1x3x128xf32> to vector<3x128xf32>
    %43 = vector.shape_cast %40 : vector<3x128xf32> to vector<1x3x128xf32>
    tpu.vector_store %arg7[%c0_30, %c0_31, %c0_32], %43 {strides = array<i32>} : memref<1x3x128xf32, #tpu.memory_space<vmem>>, vector<1x3x128xf32>,
    %44 = vector.extract_strided_slice %30 {offsets = [3, 0], sizes = [8, 128], strides = [1, 1]} : vector<128x128xf32> to vector<8x128xf32>
    %45 = vector.extract_strided_slice %44 {offsets = [0, 0], sizes = [3, 128], strides = [1, 1]} : vector<8x128xf32> to vector<3x128xf32>
    %46 = vector.extract_strided_slice %44 {offsets = [3, 0], sizes = [3, 128], strides = [1, 1]} : vector<8x128xf32> to vector<3x128xf32>
    %47 = arith.negf %46 : vector<3x128xf32>
    %48 = math.exp %47 : vector<3x128xf32>
    %cst_33 = arith.constant 1.000000e+00 : f32
    %49 = vector.broadcast %cst_33 : f32 to vector<3x128xf32>
    %50 = arith.addf %49, %48 : vector<3x128xf32>
    %51 = arith.divf %49, %50 : vector<3x128xf32>
    %cst_34 = arith.constant 5.000000e-01 : f32
    %52 = vector.broadcast %cst_34 : f32 to vector<3x128xf32>
    %53 = arith.subf %51, %52 : vector<3x128xf32>
    %54 = vector.extract_strided_slice %44 {offsets = [6, 0], sizes = [2, 128], strides = [1, 1]} : vector<8x128xf32> to vector<2x128xf32>
    %55 = arith.mulf %54, %54 : vector<2x128xf32>
    %cst_35 = arith.constant dense<0.000000e+00> : vector<128xf32>
    %56 = vector.multi_reduction <add>, %55, %cst_35 [0] : vector<2x128xf32> to vector<128xf32>
    %57 = vector.shape_cast %56 : vector<128xf32> to vector<1x128xf32>
    %cst_36 = arith.constant 1.000000e-24 : f32
    %58 = vector.broadcast %cst_36 : f32 to vector<1x128xf32>
    %59 = arith.maximumf %57, %58 : vector<1x128xf32>
    %60 = math.rsqrt %59 : vector<1x128xf32>
    %61 = vector.broadcast %60 : vector<1x128xf32> to vector<2x128xf32>
    %62 = arith.mulf %54, %61 : vector<2x128xf32>
    %63 = tpu.concatenate %45, %53, %62 in 0 : vector<3x128xf32>, vector<3x128xf32>, vector<2x128xf32> -> vector<8x128xf32>
    %c0_37 = arith.constant 0 : index
    %c0_38 = arith.constant 0 : index
    %c0_39 = arith.constant 0 : index
    %64 = vector.load %arg8[%c0_37, %c0_38, %c0_39] : memref<1x8x128xf32, #tpu.memory_space<vmem>>, vector<1x8x128xf32>
    %65 = vector.shape_cast %64 : vector<1x8x128xf32> to vector<8x128xf32>
    %66 = vector.shape_cast %63 : vector<8x128xf32> to vector<1x8x128xf32>
    tpu.vector_store %arg8[%c0_37, %c0_38, %c0_39], %66 {strides = array<i32>} : memref<1x8x128xf32, #tpu.memory_space<vmem>>, vector<1x8x128xf32>,
    return
  }
  func.func @transform_0(%arg0: i32, %arg1: i32) -> (i32, i32, i32, i32) {
    %c0_i32 = arith.constant 0 : i32
    %c0_i32_0 = arith.constant 0 : i32
    %c0_i32_1 = arith.constant 0 : i32
    return %arg0, %arg1, %c0_i32, %c0_i32_0 : i32, i32, i32, i32
  }
  func.func @transform_1(%arg0: i32, %arg1: i32) -> (i32, i32, i32) {
    %c0_i32 = arith.constant 0 : i32
    %c0_i32_0 = arith.constant 0 : i32
    %c0_i32_1 = arith.constant 0 : i32
    %c0_i32_2 = arith.constant 0 : i32
    return %c0_i32, %c0_i32_0, %c0_i32_1 : i32, i32, i32
  }
  func.func @transform_2(%arg0: i32, %arg1: i32) -> (i32, i32) {
    %c0_i32 = arith.constant 0 : i32
    %c0_i32_0 = arith.constant 0 : i32
    %c0_i32_1 = arith.constant 0 : i32
    return %c0_i32, %c0_i32_0 : i32, i32
  }
  func.func @transform_3(%arg0: i32, %arg1: i32) -> (i32, i32) {
    %c0_i32 = arith.constant 0 : i32
    %c0_i32_0 = arith.constant 0 : i32
    %c0_i32_1 = arith.constant 0 : i32
    return %c0_i32, %c0_i32_0 : i32, i32
  }
  func.func @transform_4(%arg0: i32, %arg1: i32) -> (i32, i32) {
    %c0_i32 = arith.constant 0 : i32
    %c0_i32_0 = arith.constant 0 : i32
    %c0_i32_1 = arith.constant 0 : i32
    return %c0_i32, %c0_i32_0 : i32, i32
  }
  func.func @transform_5(%arg0: i32, %arg1: i32) -> (i32, i32, i32) {
    %c0_i32 = arith.constant 0 : i32
    %c0_i32_0 = arith.constant 0 : i32
    return %arg0, %c0_i32, %arg1 : i32, i32, i32
  }
  func.func @transform_6(%arg0: i32, %arg1: i32) -> (i32, i32, i32) {
    %c0_i32 = arith.constant 0 : i32
    %c0_i32_0 = arith.constant 0 : i32
    return %arg0, %c0_i32, %arg1 : i32, i32, i32
  }
}

</mosaic_0001>

<llo_original>
// kernel: tpu_custom_call.1
$region0: #{tpu_custom_call.1}
  #allocation0 [shape = 'u32[]', space=smem, size = 0x4, offset = 0x4, fixed_abs, tag = 'smem constant byte address 0x4 - core index']
  #allocation1 [shape = 'u32[144,128]{1,0:T(1,128)}', space=vmem, size = 0x12000, scoped, tag = 'internal scratch']
  %s0 = inlined_call_operand.vmem [shape: bf16[2,4,192,12], index: 0, kind: input, shape index: {}]
  %s1 = inlined_call_operand.vmem [shape: bf16[3,12,128], index: 1, kind: input, shape index: {}]
  %s2 = inlined_call_operand.vmem [shape: f32[1,128], index: 2, kind: input, shape index: {}]
  %s3 = inlined_call_operand.vmem [shape: bf16[128,128], index: 3, kind: input, shape index: {}]
  %s4 = inlined_call_operand.vmem [shape: f32[1,128], index: 4, kind: input, shape index: {}]
  %s5 = inlined_call_operand.vmem [shape: f32[2,3,512], index: 5, kind: output, shape index: {0}]
  %s6 = inlined_call_operand.hbm [shape: f32[2,8,512], index: 6, kind: output, shape index: {1}]
  %7 = xla_tuple %s5, %s6
  %s8 = sld [smem:[#allocation0]]
  $region61: #{tpu_custom_call.1} parent=0
    _
  %s10 = ssub.s32 1, %s8
  %s11 = scalar_select 0, %s10, %s8
  $region1: #{tpu_custom_call.1} parent=0
    #allocation2 [shape = 'u8[8192]{0}', space=vmem, size = 0x2000, scoped, tag = 'output window, operand 1']
    #allocation3 [shape = 's32[2]{0}', space=sflag, size = 0x8, scoped, tag = 'scoped memory for tpu_custom_call.1']
    %12 = vsyncpa [#allocation3], 0
    %s13 = scalar_lea.sflag [#allocation3], 1
    %14 = vsyncpa %s13, 0
    loop: start=0, step=1, limit=10
    $region2: #{tpu_custom_call.1} parent=1 // loop_pre_header
      _
    $region3: #{tpu_custom_call.1} parent=1 // loop_header
      %s16 = sphi 0, %s20
      %p17 = scmp.ge.s32.totalorder %s16, 10
      %s23 = sphi 0, %s35
      %s24 = sphi 0, %s31
      %s25 = sphi 0, %s23
      %s26 = sphi 0, %s24
      %s27 = sphi 0, %s25
      %s28 = sphi 0, %s26
      %s40 = sphi 0, %s42
      %s43 = sphi 0, %s40
      %s44 = sphi 0, %s43
      %s60 = sphi 0, %s44
      %s64 = sphi 0, %s64
      %s66 = sphi 0, %s64
      %s67 = sphi 0, %s66
      %s81 = sphi 0, %s67
      %s85 = sphi 0, %s85
      %s87 = sphi 0, %s85
      %s88 = sphi 0, %s87
      %s102 = sphi 0, %s88
      %s106 = sphi 0, %s106
      %s108 = sphi 0, %s106
      %s109 = sphi 0, %s108
      %s123 = sphi 0, %s109
      %s127 = sphi 0, %s127
      %s129 = sphi 0, %s127
      %s130 = sphi 0, %s129
      %s144 = sphi 0, %s130
      %s152 = sphi 0, %s154
      %s155 = sphi 0, %s152
      %s156 = sphi 0, %s155
      %s172 = sphi 0, %s156
      %s180 = sphi 0, %s182
      %s183 = sphi 0, %s180
      %s184 = sphi 0, %s183
      %s200 = sphi 0, %s184
    $region4: #{tpu_custom_call.1} parent=1 // loop_header_branch
      %19 = sbr.rel (%p17) target = $region8
    $region5: #{tpu_custom_call.1} parent=1 // loop_body
      %s21 = ssub.s32 %s16, 1
      %s22 = ssub.s32 %s16, 2
      %s29 = sadd.s32 1, %s24
      %p30 = scmp.ge.s32.totalorder %s29, 4
      %s31 = scalar_select %p30, 0, %s29
      %s32 = sadd.s32 1, %s23
      %s33 = scalar_select %p30, %s32, %s23
      %p34 = scmp.ge.s32.totalorder %s33, 2
      %s35 = scalar_select %p34, 0, %s33
      %s36 = ssub.s32 %s23, %s35
      %s37 = ssub.s32 %s24, %s31
      %s38 = sor.u32 %s36, %s37
      %p39 = scmp.eq.s32.totalorder %s38, 0
      %s41 = sadd.s32 %s40, 1
      %s42 = scalar_select %p39, %s40, %s41
      %p45 = pneg %p39
      %p46 = scmp.eq.s32.totalorder %s16, 7
      %p47 = por %p45, %p46
      %p48 = scmp.ne.s32.totalorder %s40, %s43
      %p49 = scmp.eq.s32.totalorder %s16, 0
      %p50 = por %p48, %p49
      %p51 = scmp.ne.s32.totalorder %s40, %s43
      %p52 = scmp.eq.s32.totalorder %s21, 7
      %p53 = por %p51, %p52
      %p54 = scmp.ne.s32.totalorder %s43, %s44
      %p55 = scmp.eq.s32.totalorder %s21, 0
      %p56 = por %p54, %p55
      %p57 = scmp.ne.s32.totalorder %s43, %s44
      %p58 = scmp.eq.s32.totalorder %s22, 7
      %p59 = por %p57, %p58
      %p61 = scmp.ne.s32.totalorder %s44, %s60
      %p62 = scmp.eq.s32.totalorder %s22, 0
      %p63 = por %p61, %p62
      %s65 = sadd.s32 %s64, 1
      %p68 = scmp.eq.s32.totalorder %s16, 7
      %p69 = scmp.ne.s32.totalorder %s64, %s66
      %p70 = scmp.eq.s32.totalorder %s16, 0
      %p71 = por %p69, %p70
      %p72 = scmp.ne.s32.totalorder %s64, %s66
      %p73 = scmp.eq.s32.totalorder %s21, 7
      %p74 = por %p72, %p73
      %p75 = scmp.ne.s32.totalorder %s66, %s67
      %p76 = scmp.eq.s32.totalorder %s21, 0
      %p77 = por %p75, %p76
      %p78 = scmp.ne.s32.totalorder %s66, %s67
      %p79 = scmp.eq.s32.totalorder %s22, 7
      %p80 = por %p78, %p79
      %p82 = scmp.ne.s32.totalorder %s67, %s81
      %p83 = scmp.eq.s32.totalorder %s22, 0
      %p84 = por %p82, %p83
      %s86 = sadd.s32 %s85, 1
      %p89 = scmp.eq.s32.totalorder %s16, 7
      %p90 = scmp.ne.s32.totalorder %s85, %s87
      %p91 = scmp.eq.s32.totalorder %s16, 0
      %p92 = por %p90, %p91
      %p93 = scmp.ne.s32.totalorder %s85, %s87
      %p94 = scmp.eq.s32.totalorder %s21, 7
      %p95 = por %p93, %p94
      %p96 = scmp.ne.s32.totalorder %s87, %s88
      %p97 = scmp.eq.s32.totalorder %s21, 0
      %p98 = por %p96, %p97
      %p99 = scmp.ne.s32.totalorder %s87, %s88
      %p100 = scmp.eq.s32.totalorder %s22, 7
      %p101 = por %p99, %p100
      %p103 = scmp.ne.s32.totalorder %s88, %s102
      %p104 = scmp.eq.s32.totalorder %s22, 0
      %p105 = por %p103, %p104
      %s107 = sadd.s32 %s106, 1
      %p110 = scmp.eq.s32.totalorder %s16, 7
      %p111 = scmp.ne.s32.totalorder %s106, %s108
      %p112 = scmp.eq.s32.totalorder %s16, 0
      %p113 = por %p111, %p112
      %p114 = scmp.ne.s32.totalorder %s106, %s108
      %p115 = scmp.eq.s32.totalorder %s21, 7
      %p116 = por %p114, %p115
      %p117 = scmp.ne.s32.totalorder %s108, %s109
      %p118 = scmp.eq.s32.totalorder %s21, 0
      %p119 = por %p117, %p118
      %p120 = scmp.ne.s32.totalorder %s108, %s109
      %p121 = scmp.eq.s32.totalorder %s22, 7
      %p122 = por %p120, %p121
      %p124 = scmp.ne.s32.totalorder %s109, %s123
      %p125 = scmp.eq.s32.totalorder %s22, 0
      %p126 = por %p124, %p125
      %s128 = sadd.s32 %s127, 1
      %p131 = scmp.eq.s32.totalorder %s16, 7
      %p132 = scmp.ne.s32.totalorder %s127, %s129
      %p133 = scmp.eq.s32.totalorder %s16, 0
      %p134 = por %p132, %p133
      %p135 = scmp.ne.s32.totalorder %s127, %s129
      %p136 = scmp.eq.s32.totalorder %s21, 7
      %p137 = por %p135, %p136
      %p138 = scmp.ne.s32.totalorder %s129, %s130
      %p139 = scmp.eq.s32.totalorder %s21, 0
      %p140 = por %p138, %p139
      %p141 = scmp.ne.s32.totalorder %s129, %s130
      %p142 = scmp.eq.s32.totalorder %s22, 7
      %p143 = por %p141, %p142
      %p145 = scmp.ne.s32.totalorder %s130, %s144
      %p146 = scmp.eq.s32.totalorder %s22, 0
      %p147 = por %p145, %p146
      %s148 = ssub.s32 %s23, %s35
      %s149 = ssub.s32 %s24, %s31
      %s150 = sor.u32 %s148, %s149
      %p151 = scmp.eq.s32.totalorder %s150, 0
      %s153 = sadd.s32 %s152, 1
      %s154 = scalar_select %p151, %s152, %s153
      %p157 = pneg %p151
      %p158 = scmp.eq.s32.totalorder %s16, 7
      %p159 = por %p157, %p158
      %p160 = scmp.ne.s32.totalorder %s152, %s155
      %p161 = scmp.eq.s32.totalorder %s16, 0
      %p162 = por %p160, %p161
      %p163 = scmp.ne.s32.totalorder %s152, %s155
      %p164 = scmp.eq.s32.totalorder %s21, 7
      %p165 = por %p163, %p164
      %p166 = scmp.ne.s32.totalorder %s155, %s156
      %p167 = scmp.eq.s32.totalorder %s21, 0
      %p168 = por %p166, %p167
      %p169 = scmp.ne.s32.totalorder %s155, %s156
      %p170 = scmp.eq.s32.totalorder %s22, 7
      %p171 = por %p169, %p170
      %p173 = scmp.ne.s32.totalorder %s156, %s172
      %p174 = scmp.eq.s32.totalorder %s22, 0
      %p175 = por %p173, %p174
      %s176 = ssub.s32 %s23, %s35
      %s177 = ssub.s32 %s24, %s31
      %s178 = sor.u32 %s176, %s177
      %p179 = scmp.eq.s32.totalorder %s178, 0
      %s181 = sadd.s32 %s180, 1
      %s182 = scalar_select %p179, %s180, %s181
      %p185 = pneg %p179
      %p186 = scmp.eq.s32.totalorder %s16, 7
      %p187 = por %p185, %p186
      %p188 = scmp.ne.s32.totalorder %s180, %s183
      %p189 = scmp.eq.s32.totalorder %s16, 0
      %p190 = por %p188, %p189
      %p191 = scmp.ne.s32.totalorder %s180, %s183
      %p192 = scmp.eq.s32.totalorder %s21, 7
      %p193 = por %p191, %p192
      %p194 = scmp.ne.s32.totalorder %s183, %s184
      %p195 = scmp.eq.s32.totalorder %s21, 0
      %p196 = por %p194, %p195
      %p197 = scmp.ne.s32.totalorder %s183, %s184
      %p198 = scmp.eq.s32.totalorder %s22, 7
      %p199 = por %p197, %p198
      %p201 = scmp.ne.s32.totalorder %s184, %s200
      %p202 = scmp.eq.s32.totalorder %s22, 0
      %p203 = por %p201, %p202
      %p204 = scmp.le.s32.totalorder 1, %s16
      %p205 = scmp.lt.s32.totalorder %s16, 9
      %p206 = pnand %p204, %p205
      %p207 = pneg %p206
      // Predicated region
      $region9: #{tpu_custom_call.1} parent=5 // pred_check
        _
      $region10: #{tpu_custom_call.1} parent=5 // pred_check_branch
        %209 = sbr.rel (%p206) target = $region12
      $region11: #{tpu_custom_call.1} parent=5 // pred_region
        %s210 = ssub.s32 %s16, 1
        // Predicated region
        $region13: #{tpu_custom_call.1} parent=11 // pred_check
          %p211 = pneg %p77
        $region14: #{tpu_custom_call.1} parent=11 // pred_check_branch
          %213 = sbr.rel (%p211) target = $region16
        $region15: #{tpu_custom_call.1} parent=11 // pred_region
          _
        $region16: #{tpu_custom_call.1} parent=11 // pred_fallthru
          _
        // Predicated region
        $region17: #{tpu_custom_call.1} parent=11 // pred_check
          %p214 = pneg %p98
        $region18: #{tpu_custom_call.1} parent=11 // pred_check_branch
          %216 = sbr.rel (%p214) target = $region20
        $region19: #{tpu_custom_call.1} parent=11 // pred_region
          _
        $region20: #{tpu_custom_call.1} parent=11 // pred_fallthru
          _
        // Predicated region
        $region21: #{tpu_custom_call.1} parent=11 // pred_check
          %p217 = pneg %p119
        $region22: #{tpu_custom_call.1} parent=11 // pred_check_branch
          %219 = sbr.rel (%p217) target = $region24
        $region23: #{tpu_custom_call.1} parent=11 // pred_region
          _
        $region24: #{tpu_custom_call.1} parent=11 // pred_fallthru
          _
        // Predicated region
        $region25: #{tpu_custom_call.1} parent=11 // pred_check
          %p220 = pneg %p140
        $region26: #{tpu_custom_call.1} parent=11 // pred_check_branch
          %222 = sbr.rel (%p220) target = $region28
        $region27: #{tpu_custom_call.1} parent=11 // pred_region
          _
        $region28: #{tpu_custom_call.1} parent=11 // pred_fallthru
          _
      $region12: #{tpu_custom_call.1} parent=5 // pred_fallthru
        _
      %p223 = scmp.lt.s32.totalorder %s16, 8
      // Predicated region
      $region29: #{tpu_custom_call.1} parent=5 // pred_check
        %p224 = pneg %p223
      $region30: #{tpu_custom_call.1} parent=5 // pred_check_branch
        %226 = sbr.rel (%p224) target = $region32
      $region31: #{tpu_custom_call.1} parent=5 // pred_region
        // Predicated region
        $region33: #{tpu_custom_call.1} parent=31 // pred_check
          %p227 = pneg %p50
        $region34: #{tpu_custom_call.1} parent=31 // pred_check_branch
          %229 = sbr.rel (%p227) target = $region36
        $region35: #{tpu_custom_call.1} parent=31 // pred_region
          %p230 = scmp.lt.s32.totalorder %s23, 1
          %s231 = scalar_select %p230, %s23, 1
          %p232 = scmp.lt.s32.totalorder %s24, 3
          %s233 = scalar_select %p232, %s24, 3
          %s234 = smul.addr %s233, 24
          %s235 = smul.addr %s231, 96
          %s236 = sadd.s32 %s234, %s235
          %s237 = smul.addr %s236, 4
          %s238 = scalar_lea.vmem %s0, %s237
        $region36: #{tpu_custom_call.1} parent=31 // pred_fallthru
          _
      $region32: #{tpu_custom_call.1} parent=5 // pred_fallthru
        _
      %p239 = scmp.le.s32.totalorder 1, %s16
      %p240 = scmp.lt.s32.totalorder %s16, 9
      %p241 = pnand %p239, %p240
      %p242 = pneg %p241
      // Predicated region
      $region37: #{tpu_custom_call.1} parent=5 // pred_check
        _
      $region38: #{tpu_custom_call.1} parent=5 // pred_check_branch
        %244 = sbr.rel (%p241) target = $region40
      $region39: #{tpu_custom_call.1} parent=5 // pred_region
        %s245 = ssub.s32 %s16, 1
        %p246 = scmp.lt.s32.totalorder %s25, 1
        %s247 = scalar_select %p246, %s25, 1
        %p248 = scmp.lt.s32.totalorder %s26, 3
        %s249 = scalar_select %p248, %s26, 3
        %s250 = smul.addr %s249, 24
        %s251 = smul.addr %s247, 96
        %s252 = sadd.s32 %s250, %s251
        %s253 = smul.addr %s252, 4
        %s254 = scalar_lea.vmem %s0, %s253
        %p255 = pneg %p56
        %p256 = pneg %p53
        %p257 = pneg %p77
        %p258 = pneg %p74
        %p259 = pneg %p98
        %p260 = pneg %p95
        %p261 = pneg %p119
        %p262 = pneg %p116
        %p263 = pneg %p140
        %p264 = pneg %p137
        %p265 = pneg %p168
        %p266 = pneg %p165
        %p267 = scmp.lt.s32.totalorder %s25, 1
        %s268 = scalar_select %p267, %s25, 1
        %p269 = scmp.lt.s32.totalorder %s26, 3
        %s270 = scalar_select %p269, %s26, 3
        %s271 = smul.addr %s268, 4
        %s272 = sadd.s32 %s270, %s271
        %s273 = smul.addr %s272, 4
        %s274 = scalar_lea.vmem %s5, %s273
        %p275 = pneg %p196
        %p276 = pneg %p193
        %s277 = sand.u32 %s183, 1
        %s278 = scalar_lea.sflag [#allocation3], %s277
        %s279 = sand.u32 %s183, 1
        %s280 = smul.addr %s279, 8
        %s281 = scalar_lea.vmem [#allocation2], %s280
        %p282 = scmp.lt.s32.totalorder %s25, 1
        %s283 = scalar_select %p282, %s25, 1
        %p284 = scmp.lt.s32.totalorder %s26, 3
        %s285 = scalar_select %p284, %s26, 3
        %s286 = smul.addr %s285, 24
        %s287 = smul.addr %s283, 96
        %s288 = sadd.s32 %s286, %s287
        %s289 = smul.addr %s288, 4
        %s290 = scalar_lea.vmem %s0, %s289
        %p291 = scmp.lt.s32.totalorder %s25, 1
        %s292 = scalar_select %p291, %s25, 1
        %p293 = scmp.lt.s32.totalorder %s26, 3
        %s294 = scalar_select %p293, %s26, 3
        %s295 = smul.addr %s292, 4
        %s296 = sadd.s32 %s294, %s295
        %s297 = smul.addr %s296, 4
        %s298 = scalar_lea.vmem %s5, %s297
        %v300 = vld [vmem:[%s290] sm:$0xf]
        %v301 = vld [vmem:[%s290 + $0x4] sm:$0xf]
        %v302 = vld [vmem:[%s290 + $0x8] sm:$0xf]
        %v303 = vld [vmem:[%s290 + $0xc] sm:$0xf]
        %v304 = vld [vmem:[%s290 + $0x10] sm:$0xf]
        %v305 = vld [vmem:[%s290 + $0x14] sm:$0xf]
        %v306 = vld [vmem:[%s290 + $0x18] sm:$0xf]
        %v307 = vld [vmem:[%s290 + $0x1c] sm:$0xf]
        %v308 = vld [vmem:[%s290 + $0x20] sm:$0xf]
        %v309 = vld [vmem:[%s290 + $0x24] sm:$0xf]
        %v310 = vld [vmem:[%s290 + $0x28] sm:$0xf]
        %v311 = vld [vmem:[%s290 + $0x2c] sm:$0xf]
        %v312 = vld [vmem:[%s290 + $0x30] sm:$0xf]
        %v313 = vld [vmem:[%s290 + $0x34] sm:$0xf]
        %v314 = vld [vmem:[%s290 + $0x38] sm:$0xf]
        %v315 = vld [vmem:[%s290 + $0x3c] sm:$0xf]
        %v316 = vld [vmem:[%s1] sm:$0xf]
        %v317 = vld [vmem:[%s1 + $0x4] sm:$0x3]
        %v318 = vld [vmem:[%s290 + $0x40] sm:$0xf]
        %v319 = vld [vmem:[%s290 + $0x44] sm:$0xf]
        %v320 = vld [vmem:[%s290 + $0x48] sm:$0xf]
        %v321 = vld [vmem:[%s290 + $0x4c] sm:$0xf]
        %s322 = scalar_lea.vmem %s1, 8
        %v323 = vld [vmem:[%s322] sm:$0xf]
        %v324 = vld [vmem:[%s322 + $0x4] sm:$0x3]
        %v341 = vunpack.c.l.b16 %v304
        %v342 = vunpack.c.l.b16 %v305
        %v343 = vunpack.c.l.b16 %v306
        %v344 = vunpack.c.l.b16 %v307
        %v345 = vunpack.c.l.b16 %v308
        %v346 = vunpack.c.l.b16 %v309
        %v347 = vunpack.c.l.b16 %v310
        %v348 = vunpack.c.l.b16 %v311
        %v349 = vunpack.c.l.b16 %v312
        %v350 = vunpack.c.l.b16 %v313
        %v351 = vunpack.c.l.b16 %v314
        %v352 = vunpack.c.l.b16 %v315
        %v353 = vunpack.c.l.b16 %v318
        %v354 = vunpack.c.l.b16 %v319
        %v355 = vunpack.c.l.b16 %v320
        %v356 = vunpack.c.l.b16 %v321
        %v357 = vpack.c.b16 %v342, %v341
        %v358 = vpack.c.b16 %v344, %v343
        %v359 = vpack.c.b16 %v346, %v345
        %v360 = vpack.c.b16 %v348, %v347
        %v361 = vpack.c.b16 %v350, %v349
        %v362 = vpack.c.b16 %v352, %v351
        %v363 = vpack.c.b16 %v354, %v353
        %v364 = vpack.c.b16 %v356, %v355
        %v367 = vunpack.c.l.b16 %v323
        %v368 = vunpack.c.l.b16 %v324
        %v369 = vpack.c.b16 %v368, %v367
        %vm370 = vcmask 97280
        %v372 = vsel %vm370, %v357, 0
        %v375 = vsel %vm370, %v358, 0
        %v378 = vsel %vm370, %v359, 0
        %v381 = vsel %vm370, %v360, 0
        %v384 = vsel %vm370, %v361, 0
        %v387 = vsel %vm370, %v362, 0
        %v390 = vsel %vm370, %v363, 0
        %v393 = vsel %vm370, %v364, 0
        %vm395 = vcmask 1045504
        %v397 = vsel %vm395, %v369, 0
        %399 = vmatprep.subr.bf16.mxu0 0
        %400 = vmatpush1.bf16.msra.mxu0 %v397
        %401 = vmatprep.subr.bf16.mxu0 0
        %402 = vmatpush1.bf16.msra.mxu0 0
        %403 = vmatprep.subr.bf16.mxu0 0
        %404 = vmatpush1.bf16.msra.mxu0 0
        %405 = vmatprep.subr.bf16.mxu0 0
        %406 = vmatpush1.bf16.msra.mxu0 0
        %407 = vmatprep.subr.bf16.mxu0 0
        %408 = vmatpush1.bf16.msra.mxu0 0
        %409 = vmatprep.subr.bf16.mxu0 0
        %410 = vmatpush1.bf16.msra.mxu0 0
        %411 = vmatprep.subr.bf16.mxu0 0
        %412 = vmatpush1.bf16.msra.mxu0 0
        %413 = vmatprep.subr.bf16.mxu0 0
        %414 = vmatpush1.bf16.msra.mxu0 0
        %415 = vmatprep.subr.bf16.mxu0 0
        %416 = vmatpush1.bf16.msra.mxu0 0
        %417 = vmatprep.subr.bf16.mxu0 0
        %418 = vmatpush1.bf16.msra.mxu0 0
        %419 = vmatprep.subr.bf16.mxu0 0
        %420 = vmatpush1.bf16.msra.mxu0 0
        %421 = vmatprep.subr.bf16.mxu0 0
        %422 = vmatpush1.bf16.msra.mxu0 0
        %423 = vmatprep.subr.bf16.mxu0 0
        %424 = vmatpush1.bf16.msra.mxu0 0
        %425 = vmatprep.subr.bf16.mxu0 0
        %426 = vmatpush1.bf16.msra.mxu0 0
        %427 = vmatprep.subr.bf16.mxu0 0
        %428 = vmatpush1.bf16.msra.mxu0 0
        %429 = vmatprep.subr.bf16.mxu0 0
        %430 = vmatpush1.bf16.msra.mxu0 0
        %431 = vmatprep.mubr.bf16.mxu0 0
        %432 = vmatmul.mubr.bf16.gmra.mrb[0].mxu0 %v372
        %v433 = vpop.f32.mrb[0].mxu0
        %v434 = vadd.f32 0.0, %v433
        %v435 = vpop.f32.mrb[0].mxu0
        %v436 = vpop.f32.mrb[0].mxu0
        %v437 = vadd.f32 0.0, %v436
        %v438 = vpop.f32.mrb[0].mxu0
        %439 = vmatprep.mubr.bf16.mxu0 0
        %440 = vmatmul.mubr.bf16.gmra.mrb[0].mxu0 %v375
        %v441 = vpop.f32.mrb[0].mxu0
        %v442 = vadd.f32 0.0, %v441
        %v443 = vpop.f32.mrb[0].mxu0
        %v444 = vpop.f32.mrb[0].mxu0
        %v445 = vadd.f32 0.0, %v444
        %v446 = vpop.f32.mrb[0].mxu0
        %447 = vmatprep.mubr.bf16.mxu0 0
        %448 = vmatmul.mubr.bf16.gmra.mrb[0].mxu0 %v378
        %v449 = vpop.f32.mrb[0].mxu0
        %v450 = vadd.f32 0.0, %v449
        %v451 = vpop.f32.mrb[0].mxu0
        %v452 = vpop.f32.mrb[0].mxu0
        %v453 = vadd.f32 0.0, %v452
        %v454 = vpop.f32.mrb[0].mxu0
        %455 = vmatprep.mubr.bf16.mxu0 0
        %456 = vmatmul.mubr.bf16.gmra.mrb[0].mxu0 %v381
        %v457 = vpop.f32.mrb[0].mxu0
        %v458 = vadd.f32 0.0, %v457
        %v459 = vpop.f32.mrb[0].mxu0
        %v460 = vpop.f32.mrb[0].mxu0
        %v461 = vadd.f32 0.0, %v460
        %v462 = vpop.f32.mrb[0].mxu0
        %463 = vmatprep.mubr.bf16.mxu0 0
        %464 = vmatmul.mubr.bf16.gmra.mrb[0].mxu0 %v384
        %v465 = vpop.f32.mrb[0].mxu0
        %v466 = vadd.f32 0.0, %v465
        %v467 = vpop.f32.mrb[0].mxu0
        %v468 = vpop.f32.mrb[0].mxu0
        %v469 = vadd.f32 0.0, %v468
        %v470 = vpop.f32.mrb[0].mxu0
        %471 = vmatprep.mubr.bf16.mxu0 0
        %472 = vmatmul.mubr.bf16.gmra.mrb[0].mxu0 %v387
        %v473 = vpop.f32.mrb[0].mxu0
        %v474 = vadd.f32 0.0, %v473
        %v475 = vpop.f32.mrb[0].mxu0
        %v476 = vpop.f32.mrb[0].mxu0
        %v477 = vadd.f32 0.0, %v476
        %v478 = vpop.f32.mrb[0].mxu0
        %479 = vmatprep.mubr.bf16.mxu0 0
        %480 = vmatmul.mubr.bf16.gmra.mrb[0].mxu0 %v390
        %v481 = vpop.f32.mrb[0].mxu0
        %v482 = vadd.f32 0.0, %v481
        %v483 = vpop.f32.mrb[0].mxu0
        %v484 = vpop.f32.mrb[0].mxu0
        %v485 = vadd.f32 0.0, %v484
        %v486 = vpop.f32.mrb[0].mxu0
        %487 = vmatprep.mubr.bf16.mxu0 0
        %488 = vmatmul.mubr.bf16.gmra.mrb[0].mxu0 %v393
        %v489 = vpop.f32.mrb[0].mxu0
        %v490 = vadd.f32 0.0, %v489
        %v491 = vpop.f32.mrb[0].mxu0
        %v492 = vpop.f32.mrb[0].mxu0
        %v493 = vadd.f32 0.0, %v492
        %v494 = vpop.f32.mrb[0].mxu0
        %495 = vdwg.mxu0
        %v500 = vunpack.c.l.b16 %v300
        %v501 = vunpack.c.l.b16 %v301
        %v502 = vunpack.c.l.b16 %v302
        %v503 = vunpack.c.l.b16 %v303
        %v504 = vpack.c.b16 %v501, %v500
        %v505 = vpack.c.b16 %v503, %v502
        %v508 = vunpack.c.l.b16 %v316
        %v509 = vunpack.c.l.b16 %v317
        %v510 = vpack.c.b16 %v509, %v508
        %v512 = vsel %vm370, %v504, 0
        %v515 = vsel %vm370, %v505, 0
        %v518 = vsel %vm395, %v510, 0
        %520 = vmatprep.subr.bf16.mxu0 0
        %521 = vmatpush1.bf16.msra.mxu0 %v518
        %522 = vmatprep.subr.bf16.mxu0 0
        %523 = vmatpush1.bf16.msra.mxu0 0
        %524 = vmatprep.subr.bf16.mxu0 0
        %525 = vmatpush1.bf16.msra.mxu0 0
        %526 = vmatprep.subr.bf16.mxu0 0
        %527 = vmatpush1.bf16.msra.mxu0 0
        %528 = vmatprep.subr.bf16.mxu0 0
        %529 = vmatpush1.bf16.msra.mxu0 0
        %530 = vmatprep.subr.bf16.mxu0 0
        %531 = vmatpush1.bf16.msra.mxu0 0
        %532 = vmatprep.subr.bf16.mxu0 0
        %533 = vmatpush1.bf16.msra.mxu0 0
        %534 = vmatprep.subr.bf16.mxu0 0
        %535 = vmatpush1.bf16.msra.mxu0 0
        %536 = vmatprep.subr.bf16.mxu0 0
        %537 = vmatpush1.bf16.msra.mxu0 0
        %538 = vmatprep.subr.bf16.mxu0 0
        %539 = vmatpush1.bf16.msra.mxu0 0
        %540 = vmatprep.subr.bf16.mxu0 0
        %541 = vmatpush1.bf16.msra.mxu0 0
        %542 = vmatprep.subr.bf16.mxu0 0
        %543 = vmatpush1.bf16.msra.mxu0 0
        %544 = vmatprep.subr.bf16.mxu0 0
        %545 = vmatpush1.bf16.msra.mxu0 0
        %546 = vmatprep.subr.bf16.mxu0 0
        %547 = vmatpush1.bf16.msra.mxu0 0
        %548 = vmatprep.subr.bf16.mxu0 0
        %549 = vmatpush1.bf16.msra.mxu0 0
        %550 = vmatprep.subr.bf16.mxu0 0
        %551 = vmatpush1.bf16.msra.mxu0 0
        %552 = vmatprep.mubr.bf16.mxu0 0
        %553 = vmatmul.mubr.bf16.gmra.mrb[0].mxu0 %v512
        %v554 = vpop.f32.mrb[0].mxu0
        %v555 = vadd.f32 %v434, %v554
        %v556 = vpop.f32.mrb[0].mxu0
        %v557 = vpop.f32.mrb[0].mxu0
        %v558 = vadd.f32 %v437, %v557
        %v559 = vpop.f32.mrb[0].mxu0
        %560 = vmatprep.mubr.bf16.mxu0 0
        %561 = vmatmul.mubr.bf16.gmra.mrb[0].mxu0 %v515
        %v562 = vpop.f32.mrb[0].mxu0
        %v563 = vadd.f32 %v442, %v562
        %v564 = vpop.f32.mrb[0].mxu0
        %v565 = vpop.f32.mrb[0].mxu0
        %v566 = vadd.f32 %v445, %v565
        %v567 = vpop.f32.mrb[0].mxu0
        %568 = vmatprep.mubr.bf16.mxu0 0
        %569 = vmatmul.mubr.bf16.gmra.mrb[0].mxu0 %v372
        %v570 = vpop.f32.mrb[0].mxu0
        %v571 = vadd.f32 %v450, %v570
        %v572 = vpop.f32.mrb[0].mxu0
        %v573 = vpop.f32.mrb[0].mxu0
        %v574 = vadd.f32 %v453, %v573
        %v575 = vpop.f32.mrb[0].mxu0
        %576 = vmatprep.mubr.bf16.mxu0 0
        %577 = vmatmul.mubr.bf16.gmra.mrb[0].mxu0 %v375
        %v578 = vpop.f32.mrb[0].mxu0
        %v579 = vadd.f32 %v458, %v578
        %v580 = vpop.f32.mrb[0].mxu0
        %v581 = vpop.f32.mrb[0].mxu0
        %v582 = vadd.f32 %v461, %v581
        %v583 = vpop.f32.mrb[0].mxu0
        %584 = vmatprep.mubr.bf16.mxu0 0
        %585 = vmatmul.mubr.bf16.gmra.mrb[0].mxu0 %v378
        %v586 = vpop.f32.mrb[0].mxu0
        %v587 = vadd.f32 %v466, %v586
        %v588 = vpop.f32.mrb[0].mxu0
        %v589 = vpop.f32.mrb[0].mxu0
        %v590 = vadd.f32 %v469, %v589
        %v591 = vpop.f32.mrb[0].mxu0
        %592 = vmatprep.mubr.bf16.mxu0 0
        %593 = vmatmul.mubr.bf16.gmra.mrb[0].mxu0 %v381
        %v594 = vpop.f32.mrb[0].mxu0
        %v595 = vadd.f32 %v474, %v594
        %v596 = vpop.f32.mrb[0].mxu0
        %v597 = vpop.f32.mrb[0].mxu0
        %v598 = vadd.f32 %v477, %v597
        %v599 = vpop.f32.mrb[0].mxu0
        %600 = vmatprep.mubr.bf16.mxu0 0
        %601 = vmatmul.mubr.bf16.gmra.mrb[0].mxu0 %v384
        %v602 = vpop.f32.mrb[0].mxu0
        %v603 = vadd.f32 %v482, %v602
        %v604 = vpop.f32.mrb[0].mxu0
        %v605 = vpop.f32.mrb[0].mxu0
        %v606 = vadd.f32 %v485, %v605
        %v607 = vpop.f32.mrb[0].mxu0
        %608 = vmatprep.mubr.bf16.mxu0 0
        %609 = vmatmul.mubr.bf16.gmra.mrb[0].mxu0 %v387
        %v610 = vpop.f32.mrb[0].mxu0
        %v611 = vadd.f32 %v490, %v610
        %v612 = vpop.f32.mrb[0].mxu0
        %v613 = vpop.f32.mrb[0].mxu0
        %v614 = vadd.f32 %v493, %v613
        %v615 = vpop.f32.mrb[0].mxu0
        %616 = vdwg.mxu0
        %v617 = vld [vmem:[%s290 + $0x20] sm:$0xf]
        %v618 = vld [vmem:[%s290 + $0x24] sm:$0xf]
        %v619 = vld [vmem:[%s290 + $0x28] sm:$0xf]
        %v620 = vld [vmem:[%s290 + $0x2c] sm:$0xf]
        %v621 = vld [vmem:[%s290 + $0x30] sm:$0xf]
        %v622 = vld [vmem:[%s290 + $0x34] sm:$0xf]
        %v623 = vld [vmem:[%s290 + $0x38] sm:$0xf]
        %v624 = vld [vmem:[%s290 + $0x3c] sm:$0xf]
        %v625 = vld [vmem:[%s290 + $0x40] sm:$0xf]
        %v626 = vld [vmem:[%s290 + $0x44] sm:$0xf]
        %v627 = vld [vmem:[%s290 + $0x48] sm:$0xf]
        %v628 = vld [vmem:[%s290 + $0x4c] sm:$0xf]
        %v629 = vld [vmem:[%s290 + $0x50] sm:$0xf]
        %v630 = vld [vmem:[%s290 + $0x54] sm:$0xf]
        %v631 = vld [vmem:[%s290 + $0x58] sm:$0xf]
        %v632 = vld [vmem:[%s290 + $0x5c] sm:$0xf]
        %s633 = scalar_lea.vmem %s1, 16
        %v634 = vld [vmem:[%s633] sm:$0xf]
        %v635 = vld [vmem:[%s633 + $0x4] sm:$0x3]
        %v652 = vunpack.c.l.b16 %v617
        %v653 = vunpack.c.l.b16 %v618
        %v654 = vunpack.c.l.b16 %v619
        %v655 = vunpack.c.l.b16 %v620
        %v656 = vunpack.c.l.b16 %v621
        %v657 = vunpack.c.l.b16 %v622
        %v658 = vunpack.c.l.b16 %v623
        %v659 = vunpack.c.l.b16 %v624
        %v660 = vunpack.c.l.b16 %v625
        %v661 = vunpack.c.l.b16 %v626
        %v662 = vunpack.c.l.b16 %v627
        %v663 = vunpack.c.l.b16 %v628
        %v664 = vunpack.c.l.b16 %v629
        %v665 = vunpack.c.l.b16 %v630
        %v666 = vunpack.c.l.b16 %v631
        %v667 = vunpack.c.l.b16 %v632
        %v668 = vpack.c.b16 %v653, %v652
        %v669 = vpack.c.b16 %v655, %v654
        %v670 = vpack.c.b16 %v657, %v656
        %v671 = vpack.c.b16 %v659, %v658
        %v672 = vpack.c.b16 %v661, %v660
        %v673 = vpack.c.b16 %v663, %v662
        %v674 = vpack.c.b16 %v665, %v664
        %v675 = vpack.c.b16 %v667, %v666
        %v678 = vunpack.c.l.b16 %v634
        %v679 = vunpack.c.l.b16 %v635
        %v680 = vpack.c.b16 %v679, %v678
        %v682 = vsel %vm370, %v668, 0
        %v685 = vsel %vm370, %v669, 0
        %v688 = vsel %vm370, %v670, 0
        %v691 = vsel %vm370, %v671, 0
        %v694 = vsel %vm370, %v672, 0
        %v697 = vsel %vm370, %v673, 0
        %v700 = vsel %vm370, %v674, 0
        %v703 = vsel %vm370, %v675, 0
        %v706 = vsel %vm395, %v680, 0
        %708 = vmatprep.subr.bf16.mxu0 0
        %709 = vmatpush1.bf16.msra.mxu0 %v706
        %710 = vmatprep.subr.bf16.mxu0 0
        %711 = vmatpush1.bf16.msra.mxu0 0
        %712 = vmatprep.subr.bf16.mxu0 0
        %713 = vmatpush1.bf16.msra.mxu0 0
        %714 = vmatprep.subr.bf16.mxu0 0
        %715 = vmatpush1.bf16.msra.mxu0 0
        %716 = vmatprep.subr.bf16.mxu0 0
        %717 = vmatpush1.bf16.msra.mxu0 0
        %718 = vmatprep.subr.bf16.mxu0 0
        %719 = vmatpush1.bf16.msra.mxu0 0
        %720 = vmatprep.subr.bf16.mxu0 0
        %721 = vmatpush1.bf16.msra.mxu0 0
        %722 = vmatprep.subr.bf16.mxu0 0
        %723 = vmatpush1.bf16.msra.mxu0 0
        %724 = vmatprep.subr.bf16.mxu0 0
        %725 = vmatpush1.bf16.msra.mxu0 0
        %726 = vmatprep.subr.bf16.mxu0 0
        %727 = vmatpush1.bf16.msra.mxu0 0
        %728 = vmatprep.subr.bf16.mxu0 0
        %729 = vmatpush1.bf16.msra.mxu0 0
        %730 = vmatprep.subr.bf16.mxu0 0
        %731 = vmatpush1.bf16.msra.mxu0 0
        %732 = vmatprep.subr.bf16.mxu0 0
        %733 = vmatpush1.bf16.msra.mxu0 0
        %734 = vmatprep.subr.bf16.mxu0 0
        %735 = vmatpush1.bf16.msra.mxu0 0
        %736 = vmatprep.subr.bf16.mxu0 0
        %737 = vmatpush1.bf16.msra.mxu0 0
        %738 = vmatprep.subr.bf16.mxu0 0
        %739 = vmatpush1.bf16.msra.mxu0 0
        %740 = vmatprep.mubr.bf16.mxu0 0
        %741 = vmatmul.mubr.bf16.gmra.mrb[0].mxu0 %v682
        %v742 = vpop.f32.mrb[0].mxu0
        %v743 = vadd.f32 0.0, %v742
        %v744 = vpop.f32.mrb[0].mxu0
        %v745 = vpop.f32.mrb[0].mxu0
        %v746 = vadd.f32 0.0, %v745
        %v747 = vpop.f32.mrb[0].mxu0
        %748 = vmatprep.mubr.bf16.mxu0 0
        %749 = vmatmul.mubr.bf16.gmra.mrb[0].mxu0 %v685
        %v750 = vpop.f32.mrb[0].mxu0
        %v751 = vadd.f32 0.0, %v750
        %v752 = vpop.f32.mrb[0].mxu0
        %v753 = vpop.f32.mrb[0].mxu0
        %v754 = vadd.f32 0.0, %v753
        %v755 = vpop.f32.mrb[0].mxu0
        %756 = vmatprep.mubr.bf16.mxu0 0
        %757 = vmatmul.mubr.bf16.gmra.mrb[0].mxu0 %v688
        %v758 = vpop.f32.mrb[0].mxu0
        %v759 = vadd.f32 0.0, %v758
        %v760 = vpop.f32.mrb[0].mxu0
        %v761 = vpop.f32.mrb[0].mxu0
        %v762 = vadd.f32 0.0, %v761
        %v763 = vpop.f32.mrb[0].mxu0
        %764 = vmatprep.mubr.bf16.mxu0 0
        %765 = vmatmul.mubr.bf16.gmra.mrb[0].mxu0 %v691
        %v766 = vpop.f32.mrb[0].mxu0
        %v767 = vadd.f32 0.0, %v766
        %v768 = vpop.f32.mrb[0].mxu0
        %v769 = vpop.f32.mrb[0].mxu0
        %v770 = vadd.f32 0.0, %v769
        %v771 = vpop.f32.mrb[0].mxu0
        %772 = vmatprep.mubr.bf16.mxu0 0
        %773 = vmatmul.mubr.bf16.gmra.mrb[0].mxu0 %v694
        %v774 = vpop.f32.mrb[0].mxu0
        %v775 = vadd.f32 0.0, %v774
        %v776 = vpop.f32.mrb[0].mxu0
        %v777 = vpop.f32.mrb[0].mxu0
        %v778 = vadd.f32 0.0, %v777
        %v779 = vpop.f32.mrb[0].mxu0
        %780 = vmatprep.mubr.bf16.mxu0 0
        %781 = vmatmul.mubr.bf16.gmra.mrb[0].mxu0 %v697
        %v782 = vpop.f32.mrb[0].mxu0
        %v783 = vadd.f32 0.0, %v782
        %v784 = vpop.f32.mrb[0].mxu0
        %v785 = vpop.f32.mrb[0].mxu0
        %v786 = vadd.f32 0.0, %v785
        %v787 = vpop.f32.mrb[0].mxu0
        %788 = vmatprep.mubr.bf16.mxu0 0
        %789 = vmatmul.mubr.bf16.gmra.mrb[0].mxu0 %v700
        %v790 = vpop.f32.mrb[0].mxu0
        %v791 = vadd.f32 0.0, %v790
        %v792 = vpop.f32.mrb[0].mxu0
        %v793 = vpop.f32.mrb[0].mxu0
        %v794 = vadd.f32 0.0, %v793
        %v795 = vpop.f32.mrb[0].mxu0
        %796 = vmatprep.mubr.bf16.mxu0 0
        %797 = vmatmul.mubr.bf16.gmra.mrb[0].mxu0 %v703
        %v798 = vpop.f32.mrb[0].mxu0
        %v799 = vadd.f32 0.0, %v798
        %v800 = vpop.f32.mrb[0].mxu0
        %v801 = vpop.f32.mrb[0].mxu0
        %v802 = vadd.f32 0.0, %v801
        %v803 = vpop.f32.mrb[0].mxu0
        %804 = vdwg.mxu0
        %v805 = vadd.f32 %v555, %v743
        %v806 = vadd.f32 %v558, %v746
        %v807 = vadd.f32 %v563, %v751
        %v808 = vadd.f32 %v566, %v754
        %v809 = vadd.f32 %v571, %v759
        %v810 = vadd.f32 %v574, %v762
        %v811 = vadd.f32 %v579, %v767
        %v812 = vadd.f32 %v582, %v770
        %v813 = vadd.f32 %v587, %v775
        %v814 = vadd.f32 %v590, %v778
        %v815 = vadd.f32 %v595, %v783
        %v816 = vadd.f32 %v598, %v786
        %v817 = vadd.f32 %v603, %v791
        %v818 = vadd.f32 %v606, %v794
        %v819 = vadd.f32 %v611, %v799
        %v820 = vadd.f32 %v614, %v802
        %v821 = vld [vmem:[%s2] sm:$0x1]
        %v823 = vlaneseq
        %v824 = vshrl.u32 %v823, 7
        %v825 = vsub.s32 0, %v824
        %v826 = vrot.slane %v821, %v825
        %v828 = vadd.f32 %v805, %v826
        %v829 = vadd.f32 %v806, %v826
        %v830 = vadd.f32 %v807, %v826
        %v831 = vadd.f32 %v808, %v826
        %v832 = vadd.f32 %v809, %v826
        %v833 = vadd.f32 %v810, %v826
        %v834 = vadd.f32 %v811, %v826
        %v835 = vadd.f32 %v812, %v826
        %v836 = vadd.f32 %v813, %v826
        %v837 = vadd.f32 %v814, %v826
        %v838 = vadd.f32 %v815, %v826
        %v839 = vadd.f32 %v816, %v826
        %v840 = vadd.f32 %v817, %v826
        %v841 = vadd.f32 %v818, %v826
        %v842 = vadd.f32 %v819, %v826
        %v843 = vadd.f32 %v820, %v826
        %v844 = vmax.f32 %v828, 0.0
        %v845 = vmax.f32 %v829, 0.0
        %v846 = vmax.f32 %v830, 0.0
        %v847 = vmax.f32 %v831, 0.0
        %v848 = vmax.f32 %v832, 0.0
        %v849 = vmax.f32 %v833, 0.0
        %v850 = vmax.f32 %v834, 0.0
        %v851 = vmax.f32 %v835, 0.0
        %v852 = vmax.f32 %v836, 0.0
        %v853 = vmax.f32 %v837, 0.0
        %v854 = vmax.f32 %v838, 0.0
        %v855 = vmax.f32 %v839, 0.0
        %v856 = vmax.f32 %v840, 0.0
        %v857 = vmax.f32 %v841, 0.0
        %v858 = vmax.f32 %v842, 0.0
        %v859 = vmax.f32 %v843, 0.0
        %v860 = vpack.c.bf16 %v845, %v844
        %v861 = vpack.c.bf16 %v847, %v846
        %v862 = vpack.c.bf16 %v849, %v848
        %v863 = vpack.c.bf16 %v851, %v850
        %v864 = vpack.c.bf16 %v853, %v852
        %v865 = vpack.c.bf16 %v855, %v854
        %v866 = vpack.c.bf16 %v857, %v856
        %v867 = vpack.c.bf16 %v859, %v858
        %v868 = vld [vmem:[%s3] sm:$0xf]
        %v869 = vld [vmem:[%s3 + $0x4] sm:$0xf]
        %v870 = vld [vmem:[%s3 + $0x8] sm:$0xf]
        %v871 = vld [vmem:[%s3 + $0xc] sm:$0xf]
        %v872 = vld [vmem:[%s3 + $0x10] sm:$0xf]
        %v873 = vld [vmem:[%s3 + $0x14] sm:$0xf]
        %v874 = vld [vmem:[%s3 + $0x18] sm:$0xf]
        %v875 = vld [vmem:[%s3 + $0x1c] sm:$0xf]
        %v876 = vld [vmem:[%s3 + $0x20] sm:$0xf]
        %v877 = vld [vmem:[%s3 + $0x24] sm:$0xf]
        %v878 = vld [vmem:[%s3 + $0x28] sm:$0xf]
        %v879 = vld [vmem:[%s3 + $0x2c] sm:$0xf]
        %v880 = vld [vmem:[%s3 + $0x30] sm:$0xf]
        %v881 = vld [vmem:[%s3 + $0x34] sm:$0xf]
        %v882 = vld [vmem:[%s3 + $0x38] sm:$0xf]
        %v883 = vld [vmem:[%s3 + $0x3c] sm:$0xf]
        %v884 = vld [vmem:[%s4] sm:$0x1]
        %v886 = vlaneseq
        %v887 = vshrl.u32 %v886, 7
        %v888 = vsub.s32 0, %v887
        %v889 = vrot.slane %v884, %v888
        %v907 = vunpack.c.l.b16 %v868
        %v908 = vunpack.c.l.b16 %v869
        %v909 = vunpack.c.l.b16 %v870
        %v910 = vunpack.c.l.b16 %v871
        %v911 = vunpack.c.l.b16 %v872
        %v912 = vunpack.c.l.b16 %v873
        %v913 = vunpack.c.l.b16 %v874
        %v914 = vunpack.c.l.b16 %v875
        %v915 = vunpack.c.l.b16 %v876
        %v916 = vunpack.c.l.b16 %v877
        %v917 = vunpack.c.l.b16 %v878
        %v918 = vunpack.c.l.b16 %v879
        %v919 = vunpack.c.l.b16 %v880
        %v920 = vunpack.c.l.b16 %v881
        %v921 = vunpack.c.l.b16 %v882
        %v922 = vunpack.c.l.b16 %v883
        %v923 = vpack.c.b16 %v908, %v907
        %v924 = vpack.c.b16 %v910, %v909
        %v925 = vpack.c.b16 %v912, %v911
        %v926 = vpack.c.b16 %v914, %v913
        %v927 = vpack.c.b16 %v916, %v915
        %v928 = vpack.c.b16 %v918, %v917
        %v929 = vpack.c.b16 %v920, %v919
        %v930 = vpack.c.b16 %v922, %v921
        %939 = vmatprep.subr.bf16.mxu0 0
        %940 = vmatpush1.bf16.msra.mxu0 %v923
        %941 = vmatprep.subr.bf16.mxu0 0
        %942 = vmatpush1.bf16.msra.mxu0 %v924
        %943 = vmatprep.subr.bf16.mxu0 0
        %944 = vmatpush1.bf16.msra.mxu0 %v925
        %945 = vmatprep.subr.bf16.mxu0 0
        %946 = vmatpush1.bf16.msra.mxu0 %v926
        %947 = vmatprep.subr.bf16.mxu0 0
        %948 = vmatpush1.bf16.msra.mxu0 %v927
        %949 = vmatprep.subr.bf16.mxu0 0
        %950 = vmatpush1.bf16.msra.mxu0 %v928
        %951 = vmatprep.subr.bf16.mxu0 0
        %952 = vmatpush1.bf16.msra.mxu0 %v929
        %953 = vmatprep.subr.bf16.mxu0 0
        %954 = vmatpush1.bf16.msra.mxu0 %v930
        %955 = vmatprep.subr.bf16.mxu0 0
        %956 = vmatpush1.bf16.msra.mxu0 0
        %957 = vmatprep.subr.bf16.mxu0 0
        %958 = vmatpush1.bf16.msra.mxu0 0
        %959 = vmatprep.subr.bf16.mxu0 0
        %960 = vmatpush1.bf16.msra.mxu0 0
        %961 = vmatprep.subr.bf16.mxu0 0
        %962 = vmatpush1.bf16.msra.mxu0 0
        %963 = vmatprep.subr.bf16.mxu0 0
        %964 = vmatpush1.bf16.msra.mxu0 0
        %965 = vmatprep.subr.bf16.mxu0 0
        %966 = vmatpush1.bf16.msra.mxu0 0
        %967 = vmatprep.subr.bf16.mxu0 0
        %968 = vmatpush1.bf16.msra.mxu0 0
        %969 = vmatprep.subr.bf16.mxu0 0
        %970 = vmatpush1.bf16.msra.mxu0 0
        %971 = vmatprep.mubr.bf16.mxu0 0
        %972 = vmatmul.mubr.bf16.gmra.mrb[0].mxu0 %v860
        %v973 = vpop.f32.mrb[0].mxu0
        %v974 = vadd.f32 %v889, %v973
        %v975 = vpop.f32.mrb[0].mxu0
        %v976 = vpop.f32.mrb[0].mxu0
        %v977 = vadd.f32 %v889, %v976
        %v978 = vpop.f32.mrb[0].mxu0
        %979 = vmatprep.mubr.bf16.mxu0 0
        %980 = vmatmul.mubr.bf16.gmra.mrb[0].mxu0 %v861
        %v981 = vpop.f32.mrb[0].mxu0
        %v982 = vadd.f32 %v889, %v981
        %v983 = vpop.f32.mrb[0].mxu0
        %v984 = vpop.f32.mrb[0].mxu0
        %v985 = vadd.f32 %v889, %v984
        %v986 = vpop.f32.mrb[0].mxu0
        %987 = vmatprep.mubr.bf16.mxu0 0
        %988 = vmatmul.mubr.bf16.gmra.mrb[0].mxu0 %v862
        %v989 = vpop.f32.mrb[0].mxu0
        %v990 = vadd.f32 %v889, %v989
        %v991 = vpop.f32.mrb[0].mxu0
        %v992 = vpop.f32.mrb[0].mxu0
        %v993 = vadd.f32 %v889, %v992
        %v994 = vpop.f32.mrb[0].mxu0
        %995 = vmatprep.mubr.bf16.mxu0 0
        %996 = vmatmul.mubr.bf16.gmra.mrb[0].mxu0 %v863
        %v997 = vpop.f32.mrb[0].mxu0
        %v998 = vadd.f32 %v889, %v997
        %v999 = vpop.f32.mrb[0].mxu0
        %v1000 = vpop.f32.mrb[0].mxu0
        %v1001 = vadd.f32 %v889, %v1000
        %v1002 = vpop.f32.mrb[0].mxu0
        %1003 = vmatprep.mubr.bf16.mxu0 0
        %1004 = vmatmul.mubr.bf16.gmra.mrb[0].mxu0 %v864
        %v1005 = vpop.f32.mrb[0].mxu0
        %v1006 = vadd.f32 %v889, %v1005
        %v1007 = vpop.f32.mrb[0].mxu0
        %v1008 = vpop.f32.mrb[0].mxu0
        %v1009 = vadd.f32 %v889, %v1008
        %v1010 = vpop.f32.mrb[0].mxu0
        %1011 = vmatprep.mubr.bf16.mxu0 0
        %1012 = vmatmul.mubr.bf16.gmra.mrb[0].mxu0 %v865
        %v1013 = vpop.f32.mrb[0].mxu0
        %v1014 = vadd.f32 %v889, %v1013
        %v1015 = vpop.f32.mrb[0].mxu0
        %v1016 = vpop.f32.mrb[0].mxu0
        %v1017 = vadd.f32 %v889, %v1016
        %v1018 = vpop.f32.mrb[0].mxu0
        %1019 = vmatprep.mubr.bf16.mxu0 0
        %1020 = vmatmul.mubr.bf16.gmra.mrb[0].mxu0 %v866
        %v1021 = vpop.f32.mrb[0].mxu0
        %v1022 = vadd.f32 %v889, %v1021
        %v1023 = vpop.f32.mrb[0].mxu0
        %v1024 = vpop.f32.mrb[0].mxu0
        %v1025 = vadd.f32 %v889, %v1024
        %v1026 = vpop.f32.mrb[0].mxu0
        %1027 = vmatprep.mubr.bf16.mxu0 0
        %1028 = vmatmul.mubr.bf16.gmra.mrb[0].mxu0 %v867
        %v1029 = vpop.f32.mrb[0].mxu0
        %v1030 = vadd.f32 %v889, %v1029
        %v1031 = vpop.f32.mrb[0].mxu0
        %v1032 = vpop.f32.mrb[0].mxu0
        %v1033 = vadd.f32 %v889, %v1032
        %v1034 = vpop.f32.mrb[0].mxu0
        %1035 = vdwg.mxu0
        %1036 = vxpose.xlu0.b32.start [1/16] %v974, 128
        %1037 = vxpose.xlu0.b32.cont [2/16] %v977, 128
        %1038 = vxpose.xlu0.b32.cont [3/16] %v982, 128
        %1039 = vxpose.xlu0.b32.cont [4/16] %v985, 128
        %1040 = vxpose.xlu0.b32.cont [5/16] %v990, 128
        %1041 = vxpose.xlu0.b32.cont [6/16] %v993, 128
        %1042 = vxpose.xlu0.b32.cont [7/16] %v998, 128
        %1043 = vxpose.xlu0.b32.cont [8/16] %v1001, 128
        %1044 = vxpose.xlu0.b32.cont [9/16] %v1006, 128
        %1045 = vxpose.xlu0.b32.cont [10/16] %v1009, 128
        %1046 = vxpose.xlu0.b32.cont [11/16] %v1014, 128
        %1047 = vxpose.xlu0.b32.cont [12/16] %v1017, 128
        %1048 = vxpose.xlu0.b32.cont [13/16] %v1022, 128
        %1049 = vxpose.xlu0.b32.cont [14/16] %v1025, 128
        %1050 = vxpose.xlu0.b32.cont [15/16] %v1030, 128
        %1051 = vxpose.xlu0.b32.end [16/16] %v1033, 128
        %v1052 = vpop.trf.xlu0
        %v1053 = vpop.trf.xlu0
        %v1054 = vpop.trf.xlu0
        %v1055 = vpop.trf.xlu0
        %v1056 = vpop.trf.xlu0
        %v1057 = vpop.trf.xlu0
        %v1058 = vpop.trf.xlu0
        %v1059 = vpop.trf.xlu0
        %v1060 = vpop.trf.xlu0
        %v1061 = vpop.trf.xlu0
        %v1062 = vpop.trf.xlu0
        %v1063 = vpop.trf.xlu0
        %v1064 = vpop.trf.xlu0
        %v1065 = vpop.trf.xlu0
        %v1066 = vpop.trf.xlu0
        %v1067 = vpop.trf.xlu0
        %v1068 = vxor.u32 %v1052, 2147483648
        %v1069 = vmul.f32 %v1068, 1.442695
        %v1070 = vpow.pop %v1069
        %v1071 = vadd.f32 %v1070, 1.0
        %v1072 = vrcp.pop %v1071
        %v1073 = vmul.f32 1.0, %v1072
        %v1074 = vmax.f32 %v1073, 0.0001
        %v1075 = vmin.f32 %v1074, 0.9999
        %1076 = vst [vmem:[%s298] sm:$0x7] %v1075
        %v1077 = vxor.u32 %v1053, 2147483648
        %v1078 = vmul.f32 %v1077, 1.442695
        %v1079 = vpow.pop %v1078
        %v1080 = vadd.f32 %v1079, 1.0
        %v1081 = vrcp.pop %v1080
        %v1082 = vmul.f32 1.0, %v1081
        %v1083 = vsub.f32 %v1073, 0.5
        %v1084 = vsub.f32 %v1082, 0.5
        %v1085 = vmul.f32 %v1053, %v1053
        %v1087 = vrot.slane %v1085, 1
        %vm1089 = vcmask 1041408
        %v1090 = vsel %vm1089, %v1087, 0.0
        %v1091 = vrot.slane %v1090, 4
        %v1092 = vadd.f32 %v1090, %v1091
        %v1093 = vrot.slane %v1092, 2
        %v1094 = vadd.f32 %v1092, %v1093
        %v1095 = vrot.slane %v1094, 1
        %v1096 = vadd.f32 %v1094, %v1095
        %v1097 = vmax.f32 %v1096, 1e-24
        %v1098 = vrsqrt.pop %v1097
        %v1099 = vmul.f32 %v1053, %v1098
        %v1101 = vrot.slane %v1052, 3
        %vm1105 = vcmask 1044480
        %v1106 = vrot.slane %v1083, 3
        %v1107 = vrot.slane %v1084, 3
        %v1108 = vsel %vm1105, %v1106, %v1107
        %v1111 = vrot.slane %v1099, 3
        %vm1113 = vcmask 1042432
        %v1114 = vsel %vm1113, %v1101, %v1108
        %v1115 = vsel %vm395, %v1114, %v1111
        %1116 = vst [vmem:[%s281] sm:$0xff] %v1115
        %p1117 = scmp.lt.s32.totalorder %s25, 1
        %s1118 = scalar_select %p1117, %s25, 1
        %p1119 = scmp.lt.s32.totalorder %s26, 3
        %s1120 = scalar_select %p1119, %s26, 3
        %s1121 = smul.addr %s1118, 4
        %s1122 = sadd.s32 %s1120, %s1121
        %s1123 = smul.addr %s1122, 4
        %s1124 = scalar_lea.vmem %s5, %s1123
        %s1125 = sand.u32 %s183, 1
        %s1126 = scalar_lea.sflag [#allocation3], %s1125
        %s1127 = sand.u32 %s183, 1
        %s1128 = smul.addr %s1127, 8
        %s1129 = scalar_lea.vmem [#allocation2], %s1128
        // Predicated region
        $region41: #{tpu_custom_call.1} parent=39 // pred_check
          %p1130 = pneg %p165
        $region42: #{tpu_custom_call.1} parent=39 // pred_check_branch
          %1132 = sbr.rel (%p1130) target = $region44
        $region43: #{tpu_custom_call.1} parent=39 // pred_region
          _
        $region44: #{tpu_custom_call.1} parent=39 // pred_fallthru
          _
        // Predicated region
        $region45: #{tpu_custom_call.1} parent=39 // pred_check
          %p1133 = pneg %p193
        $region46: #{tpu_custom_call.1} parent=39 // pred_check_branch
          %1135 = sbr.rel (%p1133) target = $region48
        $region47: #{tpu_custom_call.1} parent=39 // pred_region
          %s1137 = ssub.s32 128, 128
          %1138 = vsyncadd %s1126, %s1137
          %s1139 = smul.addr %s25, 4
          %s1140 = sadd.s32 %s26, %s1139
          %s1141 = smul.addr %s1140, 128
          %s1142 = scalar_lea.hbm %s6, %s1141
          %s1144 = sshll.u32 %s1129, 4
          %s1145 = int_to_ptr.vmem [resolvable:$true] %s1144
          %1147 = dma.vmem_to_hbm [thread:$0]  %s1145, 128, %s1142, %s1126
        $region48: #{tpu_custom_call.1} parent=39 // pred_fallthru
          _
      $region40: #{tpu_custom_call.1} parent=5 // pred_fallthru
        _
      %p1148 = scmp.le.s32.totalorder 2, %s16
      // Predicated region
      $region49: #{tpu_custom_call.1} parent=5 // pred_check
        %p1149 = pneg %p1148
      $region50: #{tpu_custom_call.1} parent=5 // pred_check_branch
        %1151 = sbr.rel (%p1149) target = $region52
      $region51: #{tpu_custom_call.1} parent=5 // pred_region
        %s1152 = ssub.s32 %s16, 2
        // Predicated region
        $region53: #{tpu_custom_call.1} parent=51 // pred_check
          %p1153 = pneg %p171
        $region54: #{tpu_custom_call.1} parent=51 // pred_check_branch
          %1155 = sbr.rel (%p1153) target = $region56
        $region55: #{tpu_custom_call.1} parent=51 // pred_region
          %p1156 = scmp.lt.s32.totalorder %s27, 1
          %s1157 = scalar_select %p1156, %s27, 1
          %p1158 = scmp.lt.s32.totalorder %s28, 3
          %s1159 = scalar_select %p1158, %s28, 3
          %s1160 = smul.addr %s1157, 4
          %s1161 = sadd.s32 %s1159, %s1160
          %s1162 = smul.addr %s1161, 4
          %s1163 = scalar_lea.vmem %s5, %s1162
        $region56: #{tpu_custom_call.1} parent=51 // pred_fallthru
          _
        // Predicated region
        $region57: #{tpu_custom_call.1} parent=51 // pred_check
          %p1164 = pneg %p199
        $region58: #{tpu_custom_call.1} parent=51 // pred_check_branch
          %1166 = sbr.rel (%p1164) target = $region60
        $region59: #{tpu_custom_call.1} parent=51 // pred_region
          %s1167 = sand.u32 %s184, 1
          %s1168 = scalar_lea.sflag [#allocation3], %s1167
          %s1169 = sand.u32 %s184, 1
          %s1170 = smul.addr %s1169, 8
          %s1171 = scalar_lea.vmem [#allocation2], %s1170
          %1172 = dma.done %s1168, 128
        $region60: #{tpu_custom_call.1} parent=51 // pred_fallthru
          _
      $region52: #{tpu_custom_call.1} parent=5 // pred_fallthru
        _
    $region6: #{tpu_custom_call.1} parent=1 // loop_footer
      %s20 = sadd.s32 1, %s16
    $region7: #{tpu_custom_call.1} parent=1 // loop_footer_branch
      %15 = sbr.rel target = $region3
    $region8: #{tpu_custom_call.1} parent=1 // loop_exit
      _
    %1173 = vsyncpa [#allocation3], 1
    %s1174 = scalar_lea.sflag [#allocation3], 1
    %1175 = vsyncpa %s1174, 1

</llo_original>
